<compile_context>
chip_gen: v7x
topology: tpu7x:2x2x1
jax: 0.10.0
libtpu: 0.0.40
codegen_flags: <defaults>
</compile_context>

<pallas_src>
import functools
import math

import jax
import jax.numpy as jnp
import numpy as np
from jax.experimental import pallas as pl
from jax.experimental.pallas import tpu as pltpu


def _rmse_comb9_kernel(p_ref, t_ref, thr_ref, acc_ref, *, beta, fold,
                       tile_rows, steps_per_chunk):
    """Accumulate per-lane partial sums into the resident acc block.

    acc rows  0: 8  = count(mask)            (8 sublane partial copies each)
              8:16  = sum masked (p-t)^2
             16:24  = count(mask1)
             24:32  = sum masked (p1-t1)^2
    """
    c = pl.program_id(0)            # megacore chunk   (parallel)
    s = pl.program_id(1)            # reduction step   (arbitrary)

    @pl.when(s == 0)
    def _init():
        acc_ref[...] = jnp.zeros_like(acc_ref)

    p = p_ref[...].astype(jnp.float32)
    t = t_ref[...].astype(jnp.float32)
    lanes = p.shape[1]

    # Tail mask replacing wrapper-side padding: element (f, lane j) of the
    # folded layout is original row f*fold + j//ny_pad of column j%ny_pad.
    # thr[0, j] = N - j//ny_pad, so (original row < N) <=> (f*fold < thr).
    # Rows from partial / overhung blocks and fold padding are excluded here.
    base = (c * steps_per_chunk + s) * tile_rows
    f_idx = base + jax.lax.broadcasted_iota(jnp.int32, p.shape, 0)
    in_range = (f_idx * fold) < thr_ref[...]

    # ---- masked RMSE partials (single fused select) -----------------------
    mask = (t == t) & in_range
    d = jnp.where(mask, p - t, 0.0)
    sq = d * d
    cnt = mask.astype(jnp.float32)

    # ---- log10(sqrt(. + beta) + 0.1) RMSE partials -------------------------
    p1 = jnp.log10(jnp.sqrt(p + beta) + 0.1)
    t1 = jnp.log10(jnp.sqrt(t + beta) + 0.1)   # NaN if t is NaN or t+beta < 0
    mask1 = (t1 == t1) & in_range
    d1 = jnp.where(mask1, p1 - t1, 0.0)        # NaN if p+beta < 0 (matches ref)
    sq1 = d1 * d1
    cnt1 = mask1.astype(jnp.float32)

    def psum8(x):   # (tile_rows, lanes) -> (8, lanes); elementwise adds only
        return x.reshape(tile_rows // 8, 8, lanes).sum(axis=0)

    acc_ref[0:8, :] += psum8(cnt)
    acc_ref[8:16, :] += psum8(sq)
    acc_ref[16:24, :] += psum8(cnt1)
    acc_ref[24:32, :] += psum8(sq1)


def _tensorcores_per_chip():
    try:
        kind = jax.devices()[0].device_kind.lower()
    except Exception:
        return 1
    return 2 if any(tag in kind for tag in ("v4", "v5p", "v7", "7x")) else 1


def rmse_loss_comb9(output, target, alpha, gamma=0.1, beta=1e-6):
    """Pallas implementation of RmseLossComb9.forward.

    output, target: [B, T, ny]; NaN in target marks missing entries.
    Returns a scalar float32.  Note: all-NaN columns yield NaN/inf, exactly
    like the torch reference.
    """
    B, T, ny = target.shape
    assert output.shape == (B, T, ny)
    N = B * T

    p2 = output.reshape(N, ny)
    t2 = target.reshape(N, ny)

    # ---- lowest-30% percent-bias term (XLA side) ---------------------------
    # TODO(synk): the per-column sort has no clean Pallas equivalent; the sort
    # and the three low-region sums stay in XLA, so the sorted arrays never
    # touch the Pallas kernel (removes ~50% of kernel HBM traffic).
    valid = t2 == t2
    count = jnp.sum(valid, axis=0).astype(jnp.int32)
    num_low = (0.3 * count.astype(jnp.float32)).astype(jnp.int32)
    big = jnp.asarray(jnp.inf, dtype=t2.dtype)
    sp = jnp.sort(jnp.where(valid, p2, big), axis=0).astype(jnp.float32)
    st = jnp.sort(jnp.where(valid, t2, big), axis=0).astype(jnp.float32)
    low = jnp.arange(N, dtype=jnp.int32)[:, None] < num_low[None, :]
    low_diff = jnp.sum(jnp.where(low, sp - st, 0.0), axis=0)
    low_abs = jnp.sum(jnp.where(low, jnp.abs(st), 0.0), axis=0)

    # ---- lane-dense folding for the streaming kernel -----------------------
    if ny % 128 == 0 or ny >= 512:
        fold, ny_pad = 1, ny        # full-width lane block (block dim == dim)
    else:
        ny_pad = ny                 # pad columns so fold*ny_pad stays modest
        while True:
            fold = 128 // math.gcd(ny_pad, 128)
            if fold * ny_pad <= 1024:
                break
            ny_pad += 1
    lanes = fold * ny_pad
    F = max(8, ((-(-N // fold) + 7) // 8) * 8)   # folded rows (>=8, mult of 8)
    Nf = F * fold

    pk, tk = p2, t2
    if Nf > N or ny_pad > ny:
        # Tiny alignment pad only; the fold reshape below relays the data out
        # once anyway, so this fuses (no separate full-array copies like the
        # old tile-multiple padding).  Padded rows/cols are masked in-kernel.
        pk = jnp.pad(pk, ((0, Nf - N), (0, ny_pad - ny)))
        tk = jnp.pad(tk, ((0, Nf - N), (0, ny_pad - ny)),
                     constant_values=float("nan"))
    pf = pk.reshape(F, lanes)                    # stream in native dtype
    tf = tk.reshape(F, lanes)
    itemsize = max(pf.dtype.itemsize, tf.dtype.itemsize)

    # ---- tiling: biggest tile whose VMEM footprint (2 inputs x 2 pipeline
    # buffers + ~10 block-sized f32/i32 in-kernel temporaries) fits a ~28 MiB
    # budget, safe on v7x's 64 MiB physical VMEM as well as v5e/v6e.
    bytes_per_elem = 2 * 2 * itemsize + 10 * 4
    tile_rows = (28 * 1024 * 1024) // (bytes_per_elem * lanes)
    tile_rows = int(max(8, min(8192, (tile_rows // 8) * 8)))
    tile_rows = min(tile_rows, F)
    nblocks = -(-F // tile_rows)

    # Megacore split only on 2-TensorCore parts; serial grid elsewhere.
    n_chunks = 2 if (_tensorcores_per_chip() >= 2 and nblocks >= 2) else 1
    steps_per_chunk = -(-nblocks // n_chunks)

    lane_idx = np.arange(lanes, dtype=np.int32)
    thr = jnp.asarray((N - lane_idx // ny_pad).reshape(1, lanes),
                      dtype=jnp.int32)

    kernel = functools.partial(_rmse_comb9_kernel, beta=float(beta),
                               fold=fold, tile_rows=tile_rows,
                               steps_per_chunk=steps_per_chunk)

    def data_map(c, s):
        # Clamp so the (rare) overhang steps of an odd chunk split re-use the
        # last block's DMA; their rows are masked out in-kernel by `in_range`.
        return (jnp.minimum(c * steps_per_chunk + s, nblocks - 1), 0)

    data_spec = pl.BlockSpec((tile_rows, lanes), data_map)

    block_bytes = bytes_per_elem * tile_rows * lanes
    out_bytes = n_chunks * 32 * lanes * 4 * 2
    vmem_limit = int(min(48 * 2**20,
                         max(16 * 2**20, block_bytes + out_bytes + (4 << 20))))

    elems = F * lanes
    cost = pl.CostEstimate(
        flops=16 * elems,
        transcendentals=4 * elems,
        bytes_accessed=2 * elems * itemsize + lanes * 4
        + n_chunks * 32 * lanes * 4)

    acc = pl.pallas_call(
        kernel,
        out_shape=jax.ShapeDtypeStruct((n_chunks * 32, lanes), jnp.float32),
        grid_spec=pltpu.PrefetchScalarGridSpec(
            num_scalar_prefetch=0,
            grid=(n_chunks, steps_per_chunk),
            in_specs=[data_spec, data_spec,
                      pl.BlockSpec((1, lanes), lambda c, s: (0, 0))],
            out_specs=pl.BlockSpec((32, lanes), lambda c, s: (c, 0)),
        ),
        compiler_params=pltpu.CompilerParams(
            dimension_semantics=("parallel", "arbitrary"),
            vmem_limit_bytes=vmem_limit),
        cost_estimate=cost,
    )(pf, tf, thr)

    # ---- tiny O(ny) finalize ------------------------------------------------
    acc = acc.reshape(n_chunks, 4, 8, lanes).sum(axis=(0, 2))      # (4, lanes)
    acc = acc.reshape(4, fold, ny_pad).sum(axis=1)[:, :ny]         # (4, ny)
    cnt, sqsum, cnt1, sq1sum = acc[0], acc[1], acc[2], acc[3]

    loss_rmse = jnp.sqrt(sqsum / cnt)
    loss_log_sqrt_rmse = jnp.sqrt(sq1sum / cnt1)
    pbiaslow = 100.0 * low_diff / low_abs
    per_col = ((1.0 - alpha) * loss_rmse + alpha * loss_log_sqrt_rmse
               + gamma * pbiaslow)
    return jnp.sum(per_col)


def _ref_rmse_loss_comb9(output, target, alpha, gamma=0.1, beta=1e-6):
    """Pure-JAX reference mirroring the torch per-column loop."""
    ny = target.shape[2]
    total = jnp.float32(0.0)
    for k in range(ny):
        p0 = output[:, :, k].reshape(-1).astype(jnp.float32)
        t0 = target[:, :, k].reshape(-1).astype(jnp.float32)

        mask = t0 == t0
        cnt = jnp.sum(mask.astype(jnp.float32))
        d = p0 - jnp.where(mask, t0, 0.0)
        loss_rmse = jnp.sqrt(jnp.sum(jnp.where(mask, d * d, 0.0)) / cnt)

        p1 = jnp.log10(jnp.sqrt(p0 + beta) + 0.1)
        t1 = jnp.log10(jnp.sqrt(t0 + beta) + 0.1)
        mask1 = t1 == t1
        cnt1 = jnp.sum(mask1.astype(jnp.float32))
        d1 = p1 - jnp.where(mask1, t1, 0.0)
        loss_log = jnp.sqrt(jnp.sum(jnp.where(mask1, d1 * d1, 0.0)) / cnt1)

        num_low = jnp.floor(0.3 * cnt).astype(jnp.int32)
        inf = jnp.float32(jnp.inf)
        sp = jnp.sort(jnp.where(mask, p0, inf))
        st = jnp.sort(jnp.where(mask, t0, inf))
        low = jnp.arange(sp.shape[0]) < num_low
        pbias = 100.0 * (jnp.sum(jnp.where(low, sp - st, 0.0))
                         / jnp.sum(jnp.where(low, jnp.abs(st), 0.0)))
        total = total + ((1.0 - alpha) * loss_rmse + alpha * loss_log
                         + gamma * pbias)
    return total


if __name__ == "__main__":
    key = jax.random.PRNGKey(0)
    B, T, ny = 2, 8, 4
    alpha, gamma, beta = 0.25, 0.1, 1e-6

    k1, k2, k3 = jax.random.split(key, 3)
    output = jax.random.uniform(k1, (B, T, ny), jnp.float32, 0.5, 2.0)
    target = jax.random.uniform(k2, (B, T, ny), jnp.float32, 0.5, 2.0)
    # inject some NaNs into the target to exercise the mask path
    nan_mask = jax.random.uniform(k3, (B, T, ny)) < 0.2
    target = jnp.where(nan_mask, jnp.nan, target)

    loss = rmse_loss_comb9(output, target, alpha=alpha, gamma=gamma, beta=beta)
    loss = jax.block_until_ready(loss)

    ref = _ref_rmse_loss_comb9(output, target, alpha=alpha, gamma=gamma,
                               beta=beta)
    ref = jax.block_until_ready(ref)

    assert bool(jnp.isfinite(loss)), (loss, ref)
    assert jnp.allclose(loss, ref, rtol=1e-3, atol=1e-3), (loss, ref)
    print("KERNEL_OK")
</pallas_src>

<mosaic_0001>
module attributes {stable_mosaic.version = 11 : i64} {
  func.func @_rmse_comb9_kernel(%arg0: i32, %arg1: i32, %arg2: memref<8x128xf32, #tpu.memory_space<vmem>>, %arg3: memref<8x128xf32, #tpu.memory_space<vmem>>, %arg4: memref<1x128xi32, #tpu.memory_space<vmem>>, %arg5: memref<32x128xf32, #tpu.memory_space<vmem>>) attributes {dimension_semantics = [#tpu.dimension_semantics<parallel>, #tpu.dimension_semantics<arbitrary>], iteration_bounds = array<i64: 1, 1>, scalar_prefetch = 0 : i64, scratch_operands = 0 : i64, tpu.core_type = #tpu.core_type<tc>, window_params = [{transform_indices = @transform_0, window_bounds = array<i64: 8, 128>}, {transform_indices = @transform_1, window_bounds = array<i64: 8, 128>}, {pipeline_mode = #tpu.pipeline_mode<synchronous>, transform_indices = @transform_2, window_bounds = array<i64: 1, 128>}, {transform_indices = @transform_3, window_bounds = array<i64: 32, 128>}]} {
    %c0_i32 = arith.constant 0 : i32
    %0 = arith.cmpi eq, %arg1, %c0_i32 : i32
    %1 = arith.extui %0 : i1 to i32
    %c0_i32_0 = arith.constant 0 : i32
    %2 = arith.cmpi ne, %1, %c0_i32_0 : i32
    scf.if %2 {
      %cst_30 = arith.constant 0.000000e+00 : f32
      %68 = vector.broadcast %cst_30 : f32 to vector<32x128xf32>
      %c0_31 = arith.constant 0 : index
      %c0_32 = arith.constant 0 : index
      %69 = vector.load %arg5[%c0_31, %c0_32] : memref<32x128xf32, #tpu.memory_space<vmem>>, vector<32x128xf32>
      tpu.vector_store %arg5[%c0_31, %c0_32], %68 {strides = array<i32>} : memref<32x128xf32, #tpu.memory_space<vmem>>, vector<32x128xf32>,
    } else {
    }
    %c0 = arith.constant 0 : index
    %c0_1 = arith.constant 0 : index
    %3 = vector.load %arg2[%c0, %c0_1] : memref<8x128xf32, #tpu.memory_space<vmem>>, vector<8x128xf32>
    %c0_2 = arith.constant 0 : index
    %c0_3 = arith.constant 0 : index
    %4 = vector.load %arg3[%c0_2, %c0_3] : memref<8x128xf32, #tpu.memory_space<vmem>>, vector<8x128xf32>
    %c1_i32 = arith.constant 1 : i32
    %5 = arith.muli %arg0, %c1_i32 : i32
    %6 = arith.addi %5, %arg1 : i32
    %c8_i32 = arith.constant 8 : i32
    %7 = arith.muli %6, %c8_i32 : i32
    %8 = tpu.iota {dimensions = array<i32: 0>} : vector<8x128xi32>
    %9 = vector.broadcast %7 : i32 to vector<8x128xi32>
    %10 = arith.addi %9, %8 : vector<8x128xi32>
    %c32_i32 = arith.constant 32 : i32
    %11 = vector.broadcast %c32_i32 : i32 to vector<8x128xi32>
    %12 = arith.muli %10, %11 : vector<8x128xi32>
    %c0_4 = arith.constant 0 : index
    %c0_5 = arith.constant 0 : index
    %13 = vector.load %arg4[%c0_4, %c0_5] : memref<1x128xi32, #tpu.memory_space<vmem>>, vector<1x128xi32>
    %14 = vector.broadcast %13 : vector<1x128xi32> to vector<8x128xi32>
    %15 = arith.cmpi slt, %12, %14 : vector<8x128xi32>
    %16 = arith.cmpf oeq, %4, %4 : vector<8x128xf32>
    %17 = arith.andi %16, %15 : vector<8x128xi1>
    %18 = arith.subf %3, %4 : vector<8x128xf32>
    %cst = arith.constant 0.000000e+00 : f32
    %19 = vector.broadcast %cst : f32 to vector<8x128xf32>
    %20 = arith.select %17, %18, %19 : vector<8x128xi1>, vector<8x128xf32>
    %21 = arith.mulf %20, %20 : vector<8x128xf32>
    %22 = arith.extui %17 : vector<8x128xi1> to vector<8x128xi32>
    %23 = arith.sitofp %22 : vector<8x128xi32> to vector<8x128xf32>
    %cst_6 = arith.constant 9.99999997E-7 : f32
    %24 = vector.broadcast %cst_6 : f32 to vector<8x128xf32>
    %25 = arith.addf %3, %24 : vector<8x128xf32>
    %26 = math.sqrt %25 : vector<8x128xf32>
    %cst_7 = arith.constant 1.000000e-01 : f32
    %27 = vector.broadcast %cst_7 : f32 to vector<8x128xf32>
    %28 = arith.addf %26, %27 : vector<8x128xf32>
    %29 = math.log %28 : vector<8x128xf32>
    %cst_8 = arith.constant 0.434294492 : f32
    %30 = vector.broadcast %cst_8 : f32 to vector<8x128xf32>
    %31 = arith.mulf %29, %30 : vector<8x128xf32>
    %cst_9 = arith.constant 9.99999997E-7 : f32
    %32 = vector.broadcast %cst_9 : f32 to vector<8x128xf32>
    %33 = arith.addf %4, %32 : vector<8x128xf32>
    %34 = math.sqrt %33 : vector<8x128xf32>
    %cst_10 = arith.constant 1.000000e-01 : f32
    %35 = vector.broadcast %cst_10 : f32 to vector<8x128xf32>
    %36 = arith.addf %34, %35 : vector<8x128xf32>
    %37 = math.log %36 : vector<8x128xf32>
    %cst_11 = arith.constant 0.434294492 : f32
    %38 = vector.broadcast %cst_11 : f32 to vector<8x128xf32>
    %39 = arith.mulf %37, %38 : vector<8x128xf32>
    %40 = arith.cmpf oeq, %39, %39 : vector<8x128xf32>
    %41 = arith.andi %40, %15 : vector<8x128xi1>
    %42 = arith.subf %31, %39 : vector<8x128xf32>
    %cst_12 = arith.constant 0.000000e+00 : f32
    %43 = vector.broadcast %cst_12 : f32 to vector<8x128xf32>
    %44 = arith.select %41, %42, %43 : vector<8x128xi1>, vector<8x128xf32>
    %45 = arith.mulf %44, %44 : vector<8x128xf32>
    %46 = arith.extui %41 : vector<8x128xi1> to vector<8x128xi32>
    %47 = arith.sitofp %46 : vector<8x128xi32> to vector<8x128xf32>
    %c0_13 = arith.constant 0 : index
    %c0_14 = arith.constant 0 : index
    %48 = vector.load %arg5[%c0_13, %c0_14] : memref<32x128xf32, #tpu.memory_space<vmem>>, vector<8x128xf32>
    %49 = vector.shape_cast %23 : vector<8x128xf32> to vector<1x8x128xf32>
    %cst_15 = arith.constant dense<0.000000e+00> : vector<8x128xf32>
    %50 = vector.multi_reduction <add>, %49, %cst_15 [0] : vector<1x8x128xf32> to vector<8x128xf32>
    %51 = arith.addf %48, %50 : vector<8x128xf32>
    %c0_16 = arith.constant 0 : index
    %c0_17 = arith.constant 0 : index
    %52 = vector.load %arg5[%c0_16, %c0_17] : memref<32x128xf32, #tpu.memory_space<vmem>>, vector<8x128xf32>
    tpu.vector_store %arg5[%c0_16, %c0_17], %51 {strides = array<i32>} : memref<32x128xf32, #tpu.memory_space<vmem>>, vector<8x128xf32>,
    %c8 = arith.constant 8 : index
    %c0_18 = arith.constant 0 : index
    %53 = vector.load %arg5[%c8, %c0_18] : memref<32x128xf32, #tpu.memory_space<vmem>>, vector<8x128xf32>
    %54 = vector.shape_cast %21 : vector<8x128xf32> to vector<1x8x128xf32>
    %cst_19 = arith.constant dense<0.000000e+00> : vector<8x128xf32>
    %55 = vector.multi_reduction <add>, %54, %cst_19 [0] : vector<1x8x128xf32> to vector<8x128xf32>
    %56 = arith.addf %53, %55 : vector<8x128xf32>
    %c8_20 = arith.constant 8 : index
    %c0_21 = arith.constant 0 : index
    %57 = vector.load %arg5[%c8_20, %c0_21] : memref<32x128xf32, #tpu.memory_space<vmem>>, vector<8x128xf32>
    tpu.vector_store %arg5[%c8_20, %c0_21], %56 {strides = array<i32>} : memref<32x128xf32, #tpu.memory_space<vmem>>, vector<8x128xf32>,
    %c16 = arith.constant 16 : index
    %c0_22 = arith.constant 0 : index
    %58 = vector.load %arg5[%c16, %c0_22] : memref<32x128xf32, #tpu.memory_space<vmem>>, vector<8x128xf32>
    %59 = vector.shape_cast %47 : vector<8x128xf32> to vector<1x8x128xf32>
    %cst_23 = arith.constant dense<0.000000e+00> : vector<8x128xf32>
    %60 = vector.multi_reduction <add>, %59, %cst_23 [0] : vector<1x8x128xf32> to vector<8x128xf32>
    %61 = arith.addf %58, %60 : vector<8x128xf32>
    %c16_24 = arith.constant 16 : index
    %c0_25 = arith.constant 0 : index
    %62 = vector.load %arg5[%c16_24, %c0_25] : memref<32x128xf32, #tpu.memory_space<vmem>>, vector<8x128xf32>
    tpu.vector_store %arg5[%c16_24, %c0_25], %61 {strides = array<i32>} : memref<32x128xf32, #tpu.memory_space<vmem>>, vector<8x128xf32>,
    %c24 = arith.constant 24 : index
    %c0_26 = arith.constant 0 : index
    %63 = vector.load %arg5[%c24, %c0_26] : memref<32x128xf32, #tpu.memory_space<vmem>>, vector<8x128xf32>
    %64 = vector.shape_cast %45 : vector<8x128xf32> to vector<1x8x128xf32>
    %cst_27 = arith.constant dense<0.000000e+00> : vector<8x128xf32>
    %65 = vector.multi_reduction <add>, %64, %cst_27 [0] : vector<1x8x128xf32> to vector<8x128xf32>
    %66 = arith.addf %63, %65 : vector<8x128xf32>
    %c24_28 = arith.constant 24 : index
    %c0_29 = arith.constant 0 : index
    %67 = vector.load %arg5[%c24_28, %c0_29] : memref<32x128xf32, #tpu.memory_space<vmem>>, vector<8x128xf32>
    tpu.vector_store %arg5[%c24_28, %c0_29], %66 {strides = array<i32>} : memref<32x128xf32, #tpu.memory_space<vmem>>, vector<8x128xf32>,
    return
  }
  func.func @transform_0(%arg0: i32, %arg1: i32) -> (i32, i32) {
    %c1_i32 = arith.constant 1 : i32
    %0 = arith.muli %arg0, %c1_i32 : i32
    %1 = arith.addi %0, %arg1 : i32
    %c0_i32 = arith.constant 0 : i32
    %2 = arith.minsi %1, %c0_i32 : i32
    %c0_i32_0 = arith.constant 0 : i32
    %c0_i32_1 = arith.constant 0 : i32
    return %2, %c0_i32_0 : i32, i32
  }
  func.func @transform_1(%arg0: i32, %arg1: i32) -> (i32, i32) {
    %c1_i32 = arith.constant 1 : i32
    %0 = arith.muli %arg0, %c1_i32 : i32
    %1 = arith.addi %0, %arg1 : i32
    %c0_i32 = arith.constant 0 : i32
    %2 = arith.minsi %1, %c0_i32 : i32
    %c0_i32_0 = arith.constant 0 : i32
    %c0_i32_1 = arith.constant 0 : i32
    return %2, %c0_i32_0 : i32, i32
  }
  func.func @transform_2(%arg0: i32, %arg1: i32) -> (i32, i32) {
    %c0_i32 = arith.constant 0 : i32
    %c0_i32_0 = arith.constant 0 : i32
    %c0_i32_1 = arith.constant 0 : i32
    return %c0_i32, %c0_i32_0 : i32, i32
  }
  func.func @transform_3(%arg0: i32, %arg1: i32) -> (i32, i32) {
    %c0_i32 = arith.constant 0 : i32
    %c0_i32_0 = arith.constant 0 : i32
    return %arg0, %c0_i32 : i32, i32
  }
}

</mosaic_0001>

<llo_original>
// kernel: tpu_custom_call.1
$region0: #{tpu_custom_call.1}
  #allocation0 [shape = 'u32[]', space=smem, size = 0x4, offset = 0x4, fixed_abs, tag = 'smem constant byte address 0x4 - core index']
  #allocation1 [shape = 'u32[144,128]{1,0:T(1,128)}', space=vmem, size = 0x12000, scoped, tag = 'internal scratch']
  %s0 = inlined_call_operand.hbm [shape: f32[8,128], index: 0, kind: input, shape index: {}]
  %s1 = inlined_call_operand.hbm [shape: f32[8,128], index: 1, kind: input, shape index: {}]
  %s2 = inlined_call_operand.vmem [shape: s32[1,128], index: 2, kind: input, shape index: {}]
  %s3 = inlined_call_operand.hbm [shape: f32[32,128], index: 3, kind: output, shape index: {}]
  %s4 = sld [smem:[#allocation0]]
  $region34: #{tpu_custom_call.1} parent=0
    _
  %s6 = ssub.s32 1, %s4
  %s7 = scalar_select 0, %s6, %s4
  $region1: #{tpu_custom_call.1} parent=0
    #allocation2 [shape = 'u8[4096]{0}', space=vmem, size = 0x1000, scoped, tag = 'input window, operand 0, single buffered']
    #allocation3 [shape = 's32[1]{0}', space=sflag, size = 0x4, scoped, tag = 'scoped memory for tpu_custom_call.1']
    #allocation4 [shape = 's32[1]{0}', space=sflag, size = 0x4, scoped, tag = 'scoped memory for tpu_custom_call.1']
    #allocation5 [shape = 'u8[4096]{0}', space=vmem, size = 0x1000, scoped, tag = 'input window, operand 1, single buffered']
    #allocation6 [shape = 's32[1]{0}', space=sflag, size = 0x4, scoped, tag = 'scoped memory for tpu_custom_call.1']
    #allocation7 [shape = 'u8[16384]{0}', space=vmem, size = 0x4000, scoped, tag = 'output window, operand 0, single buffered']
    %8 = vsyncpa [#allocation3], 0
    %9 = vsyncpa [#allocation6], 0
    %10 = vsyncpa [#allocation4], 0
    // Predicated region
    $region2: #{tpu_custom_call.1} parent=1 // pred_check
      _
    $region3: #{tpu_custom_call.1} parent=1 // pred_check_branch
      %12 = sbr.rel (0) target = $region5
    $region4: #{tpu_custom_call.1} parent=1 // pred_region
      %s13 = sadd.s32 0, 0
      %p14 = scmp.lt.s32.totalorder %s13, 0
      %s15 = scalar_select %p14, %s13, 0
      %s17 = ssub.s32 128, 128
      %18 = vsyncadd [#allocation3], %s17
      %s19 = smul.addr %s15, 128
      %s20 = scalar_lea.hbm %s0, %s19
      %s22 = sshll.u32 [#allocation2], 4
      %s23 = int_to_ptr.vmem [resolvable:$true] %s22
      %25 = dma.hbm_to_vmem [thread:$0]  %s20, 128, %s23, [#allocation3]
    $region5: #{tpu_custom_call.1} parent=1 // pred_fallthru
      _
    // Predicated region
    $region6: #{tpu_custom_call.1} parent=1 // pred_check
      _
    $region7: #{tpu_custom_call.1} parent=1 // pred_check_branch
      %27 = sbr.rel (0) target = $region9
    $region8: #{tpu_custom_call.1} parent=1 // pred_region
      %s28 = sadd.s32 0, 0
      %p29 = scmp.lt.s32.totalorder %s28, 0
      %s30 = scalar_select %p29, %s28, 0
      %s32 = ssub.s32 128, 128
      %33 = vsyncadd [#allocation6], %s32
      %s34 = smul.addr %s30, 128
      %s35 = scalar_lea.hbm %s1, %s34
      %s37 = sshll.u32 [#allocation5], 4
      %s38 = int_to_ptr.vmem [resolvable:$true] %s37
      %40 = dma.hbm_to_vmem [thread:$0]  %s35, 128, %s38, [#allocation6]
    $region9: #{tpu_custom_call.1} parent=1 // pred_fallthru
      _
    // Predicated region
    $region10: #{tpu_custom_call.1} parent=1 // pred_check
      _
    $region11: #{tpu_custom_call.1} parent=1 // pred_check_branch
      %42 = sbr.rel (0) target = $region13
    $region12: #{tpu_custom_call.1} parent=1 // pred_region
      _
    $region13: #{tpu_custom_call.1} parent=1 // pred_fallthru
      _
    // Predicated region
    $region14: #{tpu_custom_call.1} parent=1 // pred_check
      _
    $region15: #{tpu_custom_call.1} parent=1 // pred_check_branch
      %44 = sbr.rel (0) target = $region17
    $region16: #{tpu_custom_call.1} parent=1 // pred_region
      %45 = dma.done [#allocation3], 128
    $region17: #{tpu_custom_call.1} parent=1 // pred_fallthru
      _
    // Predicated region
    $region18: #{tpu_custom_call.1} parent=1 // pred_check
      _
    $region19: #{tpu_custom_call.1} parent=1 // pred_check_branch
      %47 = sbr.rel (0) target = $region21
    $region20: #{tpu_custom_call.1} parent=1 // pred_region
      %48 = dma.done [#allocation6], 128
    $region21: #{tpu_custom_call.1} parent=1 // pred_fallthru
      _
    %s49 = sadd.s32 0, 0
    %p50 = scmp.lt.s32.totalorder %s49, 0
    %s51 = scalar_select %p50, %s49, 0
    %s52 = sadd.s32 0, 0
    %p53 = scmp.lt.s32.totalorder %s52, 0
    %s54 = scalar_select %p53, %s52, 0
    %p55 = scmp.eq.s32.totalorder 0, 0
    // Predicated region
    $region22: #{tpu_custom_call.1} parent=1 // pred_check
      %p56 = pneg %p55
    $region23: #{tpu_custom_call.1} parent=1 // pred_check_branch
      %58 = sbr.rel (%p56) target = $region25
    $region24: #{tpu_custom_call.1} parent=1 // pred_region
      %59 = vst [vmem:[#allocation7] sm:$0xff] 0.0
      %60 = vst [vmem:[#allocation7 + $0x8] sm:$0xff] 0.0
      %61 = vst [vmem:[#allocation7 + $0x10] sm:$0xff] 0.0
      %62 = vst [vmem:[#allocation7 + $0x18] sm:$0xff] 0.0
    $region25: #{tpu_custom_call.1} parent=1 // pred_fallthru
      _
    %v63 = vld [vmem:[#allocation2] sm:$0xff]
    %v64 = vld [vmem:[#allocation5] sm:$0xff]
    %s65 = sadd.s32 0, 0
    %s66 = smul.u32 %s65, 8
    %v67 = vlaneseq
    %v68 = vshrl.u32 %v67, 7
    %v69 = vstv %s66
    %v70 = vadd.s32 %v69, %v68
    %v71 = vmul.u32 %v70, 32
    %v72 = vld [vmem:[%s2] sm:$0x1]
    %v73 = vlaneseq
    %v74 = vshrl.u32 %v73, 7
    %v75 = vsub.s32 0, %v74
    %v76 = vrot.slane %v72, %v75
    %vm77 = vcmp.lt.s32.totalorder %v71, %v76
    %vm78 = vcmp.eq.f32.partialorder %v64, %v64
    %vm79 = vmand %vm78, %vm77
    %v80 = vsub.f32 %v63, %v64
    %v81 = vsel %vm79, %v80, 0.0
    %v82 = vmul.f32 %v81, %v81
    %v83 = vsel %vm79, 1, 0
    %v84 = vcvt.s32.f32 %v83
    %v85 = vadd.f32 %v63, 1e-06
    %v86 = vrsqrt.pop %v85
    %v87 = vmul.f32 %v85, %v86
    %vm88 = vcmp.eq.f32.partialorder %v85, inf
    %v89 = vsel %vm88, %v85, %v87
    %vm90 = vcmp.eq.f32.partialorder %v85, 0.0
    %v91 = vand.u32 %v85, 2147483648
    %v92 = vsel %vm90, %v91, %v89
    %v93 = vadd.f32 %v92, 0.1
    %v94 = vlog2.pop %v93
    %v95 = vmul.f32 %v94, 0.6931472
    %v96 = vmul.f32 %v95, 0.4342945
    %v97 = vadd.f32 %v64, 1e-06
    %v98 = vrsqrt.pop %v97
    %v99 = vmul.f32 %v97, %v98
    %vm100 = vcmp.eq.f32.partialorder %v97, inf
    %v101 = vsel %vm100, %v97, %v99
    %vm102 = vcmp.eq.f32.partialorder %v97, 0.0
    %v103 = vand.u32 %v97, 2147483648
    %v104 = vsel %vm102, %v103, %v101
    %v105 = vadd.f32 %v104, 0.1
    %v106 = vlog2.pop %v105
    %v107 = vmul.f32 %v106, 0.6931472
    %v108 = vmul.f32 %v107, 0.4342945
    %vm109 = vcmp.eq.f32.partialorder %v108, %v108
    %vm110 = vmand %vm109, %vm77
    %v111 = vsub.f32 %v96, %v108
    %v112 = vsel %vm110, %v111, 0.0
    %v113 = vmul.f32 %v112, %v112
    %v114 = vsel %vm110, 1, 0
    %v115 = vcvt.s32.f32 %v114
    %v116 = vld [vmem:[#allocation7] sm:$0xff]
    %v117 = vadd.f32 %v84, 0.0
    %v118 = vadd.f32 %v116, %v117
    %119 = vst [vmem:[#allocation7] sm:$0xff] %v118
    %v120 = vld [vmem:[#allocation7 + $0x8] sm:$0xff]
    %v121 = vadd.f32 %v82, 0.0
    %v122 = vadd.f32 %v120, %v121
    %123 = vst [vmem:[#allocation7 + $0x8] sm:$0xff] %v122
    %v124 = vld [vmem:[#allocation7 + $0x10] sm:$0xff]
    %v125 = vadd.f32 %v115, 0.0
    %v126 = vadd.f32 %v124, %v125
    %127 = vst [vmem:[#allocation7 + $0x10] sm:$0xff] %v126
    %v128 = vld [vmem:[#allocation7 + $0x18] sm:$0xff]
    %v129 = vadd.f32 %v113, 0.0
    %v130 = vadd.f32 %v128, %v129
    %131 = vst [vmem:[#allocation7 + $0x18] sm:$0xff] %v130
    // Predicated region
    $region26: #{tpu_custom_call.1} parent=1 // pred_check
      _
    $region27: #{tpu_custom_call.1} parent=1 // pred_check_branch
      %133 = sbr.rel (0) target = $region29
    $region28: #{tpu_custom_call.1} parent=1 // pred_region
      %s135 = ssub.s32 512, 512
      %136 = vsyncadd [#allocation4], %s135
      %s137 = sshll.u32 [#allocation7], 4
      %s138 = int_to_ptr.vmem [resolvable:$true] %s137
      %143 = dma.vmem_to_hbm [thread:$0]  %s138, 512, %s3, [#allocation4], 128, 128, 8
    $region29: #{tpu_custom_call.1} parent=1 // pred_fallthru
      _
    // Predicated region
    $region30: #{tpu_custom_call.1} parent=1 // pred_check
      _
    $region31: #{tpu_custom_call.1} parent=1 // pred_check_branch
      %145 = sbr.rel (0) target = $region33
    $region32: #{tpu_custom_call.1} parent=1 // pred_region
      %146 = dma.done [#allocation4], 512
    $region33: #{tpu_custom_call.1} parent=1 // pred_fallthru
      _
    %147 = vsyncpa [#allocation3], 1
    %148 = vsyncpa [#allocation6], 1
    %149 = vsyncpa [#allocation4], 1

</llo_original>
